<compile_context>
chip_gen: v7x
topology: tpu7x:2x2x1
jax: 0.10.0
libtpu: 0.0.40
codegen_flags: <defaults>
</compile_context>

<pallas_src>
import jax
import jax.numpy as jnp
from jax.experimental import pallas as pl
from jax.experimental.pallas import tpu as pltpu


def _discriminator_kernel(y_ref, lt_ref,
                          we1_ref, be1_ref, we2_ref, be2_ref, we3_ref, be3_ref,
                          wc1_ref, bc1_ref, wc2_ref, bc2_ref,
                          wd1e_ref, wd1c_ref, bd1_ref,
                          wd2_ref, bd2_ref, wd3_ref, bd3_ref,
                          out_ref):
    f32, bf16 = jnp.float32, jnp.bfloat16
    mm = lambda w_ref, x: jnp.dot(w_ref[...], x, preferred_element_type=f32)
    # ReLU epilogue in f32, cast to bf16 at production (halves spill traffic).
    relu_bf16 = lambda x: jnp.maximum(x, 0.0).astype(bf16)

    # --- encoding path (feature-major: activations are (features, TM)) ------
    h = relu_bf16(mm(we1_ref, y_ref[...]) + be1_ref[...])        # (D//3, TM)
    h = relu_bf16(mm(we2_ref, h) + be2_ref[...])                 # (D//6, TM)
    enc = (mm(we3_ref, h) + be3_ref[...]).astype(bf16)           # (H,    TM)

    # --- condition path on pre-lifted theta ---------------------------------
    c = relu_bf16(mm(wc1_ref, lt_ref[...]) + bc1_ref[...])       # (H//2, TM)
    cond = (mm(wc2_ref, c) + bc2_ref[...]).astype(bf16)          # (H,    TM)

    # --- decoding over torch.cat([enc, cond], -1): split weight, no concat --
    d = mm(wd1e_ref, enc) + mm(wd1c_ref, cond) + bd1_ref[...]    # (D//6, TM)
    d = relu_bf16(d)
    d = relu_bf16(mm(wd2_ref, d) + bd2_ref[...])                 # (D//3, TM)
    out_ref[...] = (mm(wd3_ref, d) + bd3_ref[...]).astype(out_ref.dtype)


def make_params(key, input_dim, param_dim, hidden_dim):
    """Deterministic synthetic parameters in torch layout: weights are (out, in)."""
    d3, d6 = input_dim // 3, input_dim // 6
    shapes = {
        "lift_w": (20,), "lift_b": (20,),                       # Linear(1, 20)
        "we1": (d3, input_dim), "be1": (d3,),
        "we2": (d6, d3), "be2": (d6,),
        "we3": (hidden_dim, d6), "be3": (hidden_dim,),
        "wc1": (hidden_dim // 2, param_dim), "bc1": (hidden_dim // 2,),
        "wc2": (hidden_dim, hidden_dim // 2), "bc2": (hidden_dim,),
        "wd1": (d6, 2 * hidden_dim), "bd1": (d6,),
        "wd2": (d3, d6), "bd2": (d3,),
        "wd3": (input_dim, d3), "bd3": (input_dim,),
    }
    params = {}
    for k, (name, shape) in zip(jax.random.split(key, len(shapes)), shapes.items()):
        fan_in = shape[-1] if len(shape) > 1 else 1
        params[name] = (jax.random.normal(k, shape, jnp.float32)
                        / jnp.sqrt(jnp.float32(fan_in)))
    return params


def discriminator_forward_feature_major(yT, liftedT, params, *, row_tile=10240):
    """Core Pallas call.

    yT:      (D, M) feature-major rows (M = B*20), any float dtype.
    liftedT: (P, M) pre-lifted theta, feature-major.
    Returns  (D, M) float32.

    Keeping the surrounding model feature-major and calling this directly
    avoids the two full-HBM-pass layout transposes in `discriminator_forward`.
    On v7x, pick row_tile <= M/2 for production batches so both TensorCores
    get grid steps (the grid axis is marked "parallel").
    """
    f32, bf16 = jnp.float32, jnp.bfloat16
    D, M = yT.shape
    P = liftedT.shape[0]

    # Row tiling on the lane axis.  Prefer a lane-aligned tile that divides M
    # exactly (no padding copy); pad the cheap bf16 operands only as fallback.
    if M <= row_tile:
        TM, grid_n, M_pad = M, 1, M            # single tile: block == full array
    else:
        assert row_tile % 128 == 0, "row_tile must be lane-aligned"
        TM = 0
        for t in range(row_tile, row_tile // 2 - 1, -128):
            if M % t == 0:
                TM = t
                break
        if TM:
            grid_n, M_pad = M // TM, M
        else:
            TM = row_tile
            grid_n = int(pl.cdiv(M, TM))
            M_pad = TM * grid_n

    yT = yT.astype(bf16)
    liftedT = liftedT.astype(bf16)
    if M_pad != M:
        yT = jnp.pad(yT, ((0, 0), (0, M_pad - M)))
        liftedT = jnp.pad(liftedT, ((0, 0), (0, M_pad - M)))

    H = params["wc2"].shape[0]
    col = lambda b: b.reshape(-1, 1).astype(f32)
    wcast = lambda a: a.astype(bf16)

    weights = (
        wcast(params["we1"]), col(params["be1"]),
        wcast(params["we2"]), col(params["be2"]),
        wcast(params["we3"]), col(params["be3"]),
        wcast(params["wc1"]), col(params["bc1"]),
        wcast(params["wc2"]), col(params["bc2"]),
        wcast(params["wd1"][:, :H]), wcast(params["wd1"][:, H:]), col(params["bd1"]),
        wcast(params["wd2"]), col(params["bd2"]),
        wcast(params["wd3"]), col(params["bd3"]),
    )

    in_specs = [
        pl.BlockSpec((D, TM), lambda i: (0, i)),   # y tile streams over the grid
        pl.BlockSpec((P, TM), lambda i: (0, i)),   # lifted theta tile streams too
    ] + [pl.BlockSpec(a.shape, lambda i: (0, 0)) for a in weights]   # resident

    outT = pl.pallas_call(
        _discriminator_kernel,
        out_shape=jax.ShapeDtypeStruct((D, M_pad), f32),
        grid=(grid_n,),
        in_specs=in_specs,
        out_specs=pl.BlockSpec((D, TM), lambda i: (0, i)),
        compiler_params=pltpu.CompilerParams(
            dimension_semantics=("parallel",),
            vmem_limit_bytes=48 * 1024 * 1024),
    )(yT, liftedT, *weights)

    return outT if M_pad == M else outT[:, :M]


def discriminator_forward(y, theta, params, *, row_tile=10240):
    """Row-major convenience wrapper. y: (B, 20, D), theta: (B, P) -> (B, 20, D).

    The two jnp.transpose calls below are each a full HBM pass over the
    activations; a feature-major surrounding model should call
    `discriminator_forward_feature_major` directly to skip them.
    """
    B, S, D = y.shape
    assert S == 20, "sequence dim fixed to 20 by the Linear(1, 20) lifting"
    M = B * S
    # lifting Linear(1, 20) folded into a tiny broadcast:
    #   lifted[b, s, p] = theta[b, p] * lw[s] + lb[s]
    lifted = (theta[:, None, :] * params["lift_w"][None, :, None]
              + params["lift_b"][None, :, None])                  # (B, 20, P) f32
    yT = jnp.transpose(y.reshape(M, D))                           # (D, M)
    liftedT = jnp.transpose(lifted.reshape(M, -1))                # (P, M)
    outT = discriminator_forward_feature_major(yT, liftedT, params,
                                               row_tile=row_tile)
    return jnp.transpose(outT).reshape(B, S, D)


def discriminator_reference(y, theta, p):
    """Pure-JAX reference mirroring the PyTorch forward (eval mode) with the same
    precision policy as the kernel: bf16 matmul inputs, f32 accumulation."""
    f32, bf = jnp.float32, jnp.bfloat16
    relu = lambda x: jnp.maximum(x, 0.0)
    mm = lambda x, w: jnp.dot(x.astype(bf), jnp.transpose(w).astype(bf),
                              preferred_element_type=f32)
    h = relu(mm(y, p["we1"]) + p["be1"])
    h = relu(mm(h, p["we2"]) + p["be2"])
    enc = mm(h, p["we3"]) + p["be3"]

    lifted = theta[:, :, None] * p["lift_w"][None, None, :] \
        + p["lift_b"][None, None, :]                    # (B, P, 20)
    lifted = jnp.transpose(lifted, (0, 2, 1))           # (B, 20, P)
    c = relu(mm(lifted, p["wc1"]) + p["bc1"])
    cond = mm(c, p["wc2"]) + p["bc2"]

    x = jnp.concatenate([enc, cond], axis=-1)
    d = relu(mm(x, p["wd1"]) + p["bd1"])
    d = relu(mm(d, p["wd2"]) + p["bd2"])
    return mm(d, p["wd3"]) + p["bd3"]


if __name__ == "__main__":
    INPUT_DIM = 48        # divisible by 3 and 6 -> 16, 8
    PARAM_DIM = 8
    HIDDEN_DIM = 32
    BATCH = 2
    SEQ = 20              # fixed by the Linear(1, 20) lifting

    key = jax.random.PRNGKey(0)
    k_y, k_t, k_p, k_y2, k_t2, k_y3, k_t3 = jax.random.split(key, 7)
    params = make_params(k_p, INPUT_DIM, PARAM_DIM, HIDDEN_DIM)

    # Small shape (single-tile path).
    y = jax.random.normal(k_y, (BATCH, SEQ, INPUT_DIM), jnp.float32)
    theta = jax.random.normal(k_t, (BATCH, PARAM_DIM), jnp.float32)
    out = jax.block_until_ready(discriminator_forward(y, theta, params))
    ref = discriminator_reference(y, theta, params)
    assert out.shape == (BATCH, SEQ, INPUT_DIM)
    err = float(jnp.max(jnp.abs(out - ref)))
    assert err < 1e-3, f"mismatch vs reference (single tile): {err}"

    # Tiled grid path, exact-divisor tile (no padding copy): 192*20 / 1920 = 2.
    B2 = 192
    y2 = jax.random.normal(k_y2, (B2, SEQ, INPUT_DIM), jnp.float32)
    theta2 = jax.random.normal(k_t2, (B2, PARAM_DIM), jnp.float32)
    out2 = jax.block_until_ready(
        discriminator_forward(y2, theta2, params, row_tile=1920))
    ref2 = discriminator_reference(y2, theta2, params)
    assert out2.shape == (B2, SEQ, INPUT_DIM)
    err2 = float(jnp.max(jnp.abs(out2 - ref2)))
    assert err2 < 1e-3, f"mismatch vs reference (tiled grid): {err2}"

    # Tiled grid path with remainder-padding fallback (no lane-aligned divisor).
    B3 = 150
    y3 = jax.random.normal(k_y3, (B3, SEQ, INPUT_DIM), jnp.float32)
    theta3 = jax.random.normal(k_t3, (B3, PARAM_DIM), jnp.float32)
    out3 = jax.block_until_ready(
        discriminator_forward(y3, theta3, params, row_tile=1920))
    ref3 = discriminator_reference(y3, theta3, params)
    assert out3.shape == (B3, SEQ, INPUT_DIM)
    err3 = float(jnp.max(jnp.abs(out3 - ref3)))
    assert err3 < 1e-3, f"mismatch vs reference (padded tail): {err3}"

    print("KERNEL_OK")
</pallas_src>

<mosaic_0001>
module attributes {stable_mosaic.version = 11 : i64} {
  func.func @_discriminator_kernel(%arg0: i32, %arg1: memref<48x40xbf16, #tpu.memory_space<vmem>>, %arg2: memref<8x40xbf16, #tpu.memory_space<vmem>>, %arg3: memref<16x48xbf16, #tpu.memory_space<vmem>>, %arg4: memref<16x1xf32, #tpu.memory_space<vmem>>, %arg5: memref<8x16xbf16, #tpu.memory_space<vmem>>, %arg6: memref<8x1xf32, #tpu.memory_space<vmem>>, %arg7: memref<32x8xbf16, #tpu.memory_space<vmem>>, %arg8: memref<32x1xf32, #tpu.memory_space<vmem>>, %arg9: memref<16x8xbf16, #tpu.memory_space<vmem>>, %arg10: memref<16x1xf32, #tpu.memory_space<vmem>>, %arg11: memref<32x16xbf16, #tpu.memory_space<vmem>>, %arg12: memref<32x1xf32, #tpu.memory_space<vmem>>, %arg13: memref<8x32xbf16, #tpu.memory_space<vmem>>, %arg14: memref<8x32xbf16, #tpu.memory_space<vmem>>, %arg15: memref<8x1xf32, #tpu.memory_space<vmem>>, %arg16: memref<16x8xbf16, #tpu.memory_space<vmem>>, %arg17: memref<16x1xf32, #tpu.memory_space<vmem>>, %arg18: memref<48x16xbf16, #tpu.memory_space<vmem>>, %arg19: memref<48x1xf32, #tpu.memory_space<vmem>>, %arg20: memref<48x40xf32, #tpu.memory_space<vmem>>) attributes {dimension_semantics = [#tpu.dimension_semantics<parallel>], iteration_bounds = array<i64: 1>, scalar_prefetch = 0 : i64, scratch_operands = 0 : i64, tpu.core_type = #tpu.core_type<tc>, window_params = [{transform_indices = @transform_0, window_bounds = array<i64: 48, 40>}, {transform_indices = @transform_1, window_bounds = array<i64: 8, 40>}, {pipeline_mode = #tpu.pipeline_mode<synchronous>, transform_indices = @transform_2, window_bounds = array<i64: 16, 48>}, {pipeline_mode = #tpu.pipeline_mode<synchronous>, transform_indices = @transform_3, window_bounds = array<i64: 16, 1>}, {pipeline_mode = #tpu.pipeline_mode<synchronous>, transform_indices = @transform_4, window_bounds = array<i64: 8, 16>}, {pipeline_mode = #tpu.pipeline_mode<synchronous>, transform_indices = @transform_5, window_bounds = array<i64: 8, 1>}, {pipeline_mode = #tpu.pipeline_mode<synchronous>, transform_indices = @transform_6, window_bounds = array<i64: 32, 8>}, {pipeline_mode = #tpu.pipeline_mode<synchronous>, transform_indices = @transform_7, window_bounds = array<i64: 32, 1>}, {pipeline_mode = #tpu.pipeline_mode<synchronous>, transform_indices = @transform_8, window_bounds = array<i64: 16, 8>}, {pipeline_mode = #tpu.pipeline_mode<synchronous>, transform_indices = @transform_9, window_bounds = array<i64: 16, 1>}, {pipeline_mode = #tpu.pipeline_mode<synchronous>, transform_indices = @transform_10, window_bounds = array<i64: 32, 16>}, {pipeline_mode = #tpu.pipeline_mode<synchronous>, transform_indices = @transform_11, window_bounds = array<i64: 32, 1>}, {pipeline_mode = #tpu.pipeline_mode<synchronous>, transform_indices = @transform_12, window_bounds = array<i64: 8, 32>}, {pipeline_mode = #tpu.pipeline_mode<synchronous>, transform_indices = @transform_13, window_bounds = array<i64: 8, 32>}, {pipeline_mode = #tpu.pipeline_mode<synchronous>, transform_indices = @transform_14, window_bounds = array<i64: 8, 1>}, {pipeline_mode = #tpu.pipeline_mode<synchronous>, transform_indices = @transform_15, window_bounds = array<i64: 16, 8>}, {pipeline_mode = #tpu.pipeline_mode<synchronous>, transform_indices = @transform_16, window_bounds = array<i64: 16, 1>}, {pipeline_mode = #tpu.pipeline_mode<synchronous>, transform_indices = @transform_17, window_bounds = array<i64: 48, 16>}, {pipeline_mode = #tpu.pipeline_mode<synchronous>, transform_indices = @transform_18, window_bounds = array<i64: 48, 1>}, {transform_indices = @transform_19, window_bounds = array<i64: 48, 40>}]} {
    %c0 = arith.constant 0 : index
    %c0_0 = arith.constant 0 : index
    %0 = vector.load %arg1[%c0, %c0_0] : memref<48x40xbf16, #tpu.memory_space<vmem>>, vector<48x40xbf16>
    %c0_1 = arith.constant 0 : index
    %c0_2 = arith.constant 0 : index
    %1 = vector.load %arg3[%c0_1, %c0_2] : memref<16x48xbf16, #tpu.memory_space<vmem>>, vector<16x48xbf16>
    %cst = arith.constant dense<0.000000e+00> : vector<16x40xf32>
    %2 = tpu.matmul %1, %0, %cst {dimension_numbers = #tpu.dot_dimension_numbers<[1], [0], [0], [1], [0, 0, 1, 1], [], []>} : vector<16x48xbf16>, vector<48x40xbf16>, vector<16x40xf32> -> vector<16x40xf32>
    %c0_3 = arith.constant 0 : index
    %c0_4 = arith.constant 0 : index
    %3 = vector.load %arg4[%c0_3, %c0_4] : memref<16x1xf32, #tpu.memory_space<vmem>>, vector<16x1xf32>
    %4 = vector.broadcast %3 : vector<16x1xf32> to vector<16x40xf32>
    %5 = arith.addf %2, %4 : vector<16x40xf32>
    %cst_5 = arith.constant 0.000000e+00 : f32
    %6 = vector.broadcast %cst_5 : f32 to vector<16x40xf32>
    %7 = arith.maximumf %5, %6 : vector<16x40xf32>
    %8 = arith.truncf %7 : vector<16x40xf32> to vector<16x40xbf16>
    %c0_6 = arith.constant 0 : index
    %c0_7 = arith.constant 0 : index
    %9 = vector.load %arg5[%c0_6, %c0_7] : memref<8x16xbf16, #tpu.memory_space<vmem>>, vector<8x16xbf16>
    %cst_8 = arith.constant dense<0.000000e+00> : vector<8x40xf32>
    %10 = tpu.matmul %9, %8, %cst_8 {dimension_numbers = #tpu.dot_dimension_numbers<[1], [0], [0], [1], [0, 0, 1, 1], [], []>} : vector<8x16xbf16>, vector<16x40xbf16>, vector<8x40xf32> -> vector<8x40xf32>
    %c0_9 = arith.constant 0 : index
    %c0_10 = arith.constant 0 : index
    %11 = vector.load %arg6[%c0_9, %c0_10] : memref<8x1xf32, #tpu.memory_space<vmem>>, vector<8x1xf32>
    %12 = vector.broadcast %11 : vector<8x1xf32> to vector<8x40xf32>
    %13 = arith.addf %10, %12 : vector<8x40xf32>
    %cst_11 = arith.constant 0.000000e+00 : f32
    %14 = vector.broadcast %cst_11 : f32 to vector<8x40xf32>
    %15 = arith.maximumf %13, %14 : vector<8x40xf32>
    %16 = arith.truncf %15 : vector<8x40xf32> to vector<8x40xbf16>
    %c0_12 = arith.constant 0 : index
    %c0_13 = arith.constant 0 : index
    %17 = vector.load %arg7[%c0_12, %c0_13] : memref<32x8xbf16, #tpu.memory_space<vmem>>, vector<32x8xbf16>
    %cst_14 = arith.constant dense<0.000000e+00> : vector<32x40xf32>
    %18 = tpu.matmul %17, %16, %cst_14 {dimension_numbers = #tpu.dot_dimension_numbers<[1], [0], [0], [1], [0, 0, 1, 1], [], []>} : vector<32x8xbf16>, vector<8x40xbf16>, vector<32x40xf32> -> vector<32x40xf32>
    %c0_15 = arith.constant 0 : index
    %c0_16 = arith.constant 0 : index
    %19 = vector.load %arg8[%c0_15, %c0_16] : memref<32x1xf32, #tpu.memory_space<vmem>>, vector<32x1xf32>
    %20 = vector.broadcast %19 : vector<32x1xf32> to vector<32x40xf32>
    %21 = arith.addf %18, %20 : vector<32x40xf32>
    %22 = arith.truncf %21 : vector<32x40xf32> to vector<32x40xbf16>
    %c0_17 = arith.constant 0 : index
    %c0_18 = arith.constant 0 : index
    %23 = vector.load %arg2[%c0_17, %c0_18] : memref<8x40xbf16, #tpu.memory_space<vmem>>, vector<8x40xbf16>
    %c0_19 = arith.constant 0 : index
    %c0_20 = arith.constant 0 : index
    %24 = vector.load %arg9[%c0_19, %c0_20] : memref<16x8xbf16, #tpu.memory_space<vmem>>, vector<16x8xbf16>
    %cst_21 = arith.constant dense<0.000000e+00> : vector<16x40xf32>
    %25 = tpu.matmul %24, %23, %cst_21 {dimension_numbers = #tpu.dot_dimension_numbers<[1], [0], [0], [1], [0, 0, 1, 1], [], []>} : vector<16x8xbf16>, vector<8x40xbf16>, vector<16x40xf32> -> vector<16x40xf32>
    %c0_22 = arith.constant 0 : index
    %c0_23 = arith.constant 0 : index
    %26 = vector.load %arg10[%c0_22, %c0_23] : memref<16x1xf32, #tpu.memory_space<vmem>>, vector<16x1xf32>
    %27 = vector.broadcast %26 : vector<16x1xf32> to vector<16x40xf32>
    %28 = arith.addf %25, %27 : vector<16x40xf32>
    %cst_24 = arith.constant 0.000000e+00 : f32
    %29 = vector.broadcast %cst_24 : f32 to vector<16x40xf32>
    %30 = arith.maximumf %28, %29 : vector<16x40xf32>
    %31 = arith.truncf %30 : vector<16x40xf32> to vector<16x40xbf16>
    %c0_25 = arith.constant 0 : index
    %c0_26 = arith.constant 0 : index
    %32 = vector.load %arg11[%c0_25, %c0_26] : memref<32x16xbf16, #tpu.memory_space<vmem>>, vector<32x16xbf16>
    %cst_27 = arith.constant dense<0.000000e+00> : vector<32x40xf32>
    %33 = tpu.matmul %32, %31, %cst_27 {dimension_numbers = #tpu.dot_dimension_numbers<[1], [0], [0], [1], [0, 0, 1, 1], [], []>} : vector<32x16xbf16>, vector<16x40xbf16>, vector<32x40xf32> -> vector<32x40xf32>
    %c0_28 = arith.constant 0 : index
    %c0_29 = arith.constant 0 : index
    %34 = vector.load %arg12[%c0_28, %c0_29] : memref<32x1xf32, #tpu.memory_space<vmem>>, vector<32x1xf32>
    %35 = vector.broadcast %34 : vector<32x1xf32> to vector<32x40xf32>
    %36 = arith.addf %33, %35 : vector<32x40xf32>
    %37 = arith.truncf %36 : vector<32x40xf32> to vector<32x40xbf16>
    %c0_30 = arith.constant 0 : index
    %c0_31 = arith.constant 0 : index
    %38 = vector.load %arg13[%c0_30, %c0_31] : memref<8x32xbf16, #tpu.memory_space<vmem>>, vector<8x32xbf16>
    %cst_32 = arith.constant dense<0.000000e+00> : vector<8x40xf32>
    %39 = tpu.matmul %38, %22, %cst_32 {dimension_numbers = #tpu.dot_dimension_numbers<[1], [0], [0], [1], [0, 0, 1, 1], [], []>} : vector<8x32xbf16>, vector<32x40xbf16>, vector<8x40xf32> -> vector<8x40xf32>
    %c0_33 = arith.constant 0 : index
    %c0_34 = arith.constant 0 : index
    %40 = vector.load %arg14[%c0_33, %c0_34] : memref<8x32xbf16, #tpu.memory_space<vmem>>, vector<8x32xbf16>
    %cst_35 = arith.constant dense<0.000000e+00> : vector<8x40xf32>
    %41 = tpu.matmul %40, %37, %cst_35 {dimension_numbers = #tpu.dot_dimension_numbers<[1], [0], [0], [1], [0, 0, 1, 1], [], []>} : vector<8x32xbf16>, vector<32x40xbf16>, vector<8x40xf32> -> vector<8x40xf32>
    %42 = arith.addf %39, %41 : vector<8x40xf32>
    %c0_36 = arith.constant 0 : index
    %c0_37 = arith.constant 0 : index
    %43 = vector.load %arg15[%c0_36, %c0_37] : memref<8x1xf32, #tpu.memory_space<vmem>>, vector<8x1xf32>
    %44 = vector.broadcast %43 : vector<8x1xf32> to vector<8x40xf32>
    %45 = arith.addf %42, %44 : vector<8x40xf32>
    %cst_38 = arith.constant 0.000000e+00 : f32
    %46 = vector.broadcast %cst_38 : f32 to vector<8x40xf32>
    %47 = arith.maximumf %45, %46 : vector<8x40xf32>
    %48 = arith.truncf %47 : vector<8x40xf32> to vector<8x40xbf16>
    %c0_39 = arith.constant 0 : index
    %c0_40 = arith.constant 0 : index
    %49 = vector.load %arg16[%c0_39, %c0_40] : memref<16x8xbf16, #tpu.memory_space<vmem>>, vector<16x8xbf16>
    %cst_41 = arith.constant dense<0.000000e+00> : vector<16x40xf32>
    %50 = tpu.matmul %49, %48, %cst_41 {dimension_numbers = #tpu.dot_dimension_numbers<[1], [0], [0], [1], [0, 0, 1, 1], [], []>} : vector<16x8xbf16>, vector<8x40xbf16>, vector<16x40xf32> -> vector<16x40xf32>
    %c0_42 = arith.constant 0 : index
    %c0_43 = arith.constant 0 : index
    %51 = vector.load %arg17[%c0_42, %c0_43] : memref<16x1xf32, #tpu.memory_space<vmem>>, vector<16x1xf32>
    %52 = vector.broadcast %51 : vector<16x1xf32> to vector<16x40xf32>
    %53 = arith.addf %50, %52 : vector<16x40xf32>
    %cst_44 = arith.constant 0.000000e+00 : f32
    %54 = vector.broadcast %cst_44 : f32 to vector<16x40xf32>
    %55 = arith.maximumf %53, %54 : vector<16x40xf32>
    %56 = arith.truncf %55 : vector<16x40xf32> to vector<16x40xbf16>
    %c0_45 = arith.constant 0 : index
    %c0_46 = arith.constant 0 : index
    %57 = vector.load %arg18[%c0_45, %c0_46] : memref<48x16xbf16, #tpu.memory_space<vmem>>, vector<48x16xbf16>
    %cst_47 = arith.constant dense<0.000000e+00> : vector<48x40xf32>
    %58 = tpu.matmul %57, %56, %cst_47 {dimension_numbers = #tpu.dot_dimension_numbers<[1], [0], [0], [1], [0, 0, 1, 1], [], []>} : vector<48x16xbf16>, vector<16x40xbf16>, vector<48x40xf32> -> vector<48x40xf32>
    %c0_48 = arith.constant 0 : index
    %c0_49 = arith.constant 0 : index
    %59 = vector.load %arg19[%c0_48, %c0_49] : memref<48x1xf32, #tpu.memory_space<vmem>>, vector<48x1xf32>
    %60 = vector.broadcast %59 : vector<48x1xf32> to vector<48x40xf32>
    %61 = arith.addf %58, %60 : vector<48x40xf32>
    %c0_50 = arith.constant 0 : index
    %c0_51 = arith.constant 0 : index
    %62 = vector.load %arg20[%c0_50, %c0_51] : memref<48x40xf32, #tpu.memory_space<vmem>>, vector<48x40xf32>
    tpu.vector_store %arg20[%c0_50, %c0_51], %61 {strides = array<i32>} : memref<48x40xf32, #tpu.memory_space<vmem>>, vector<48x40xf32>,
    return
  }
  func.func @transform_0(%arg0: i32) -> (i32, i32) {
    %c0_i32 = arith.constant 0 : i32
    %c0_i32_0 = arith.constant 0 : i32
    return %c0_i32, %arg0 : i32, i32
  }
  func.func @transform_1(%arg0: i32) -> (i32, i32) {
    %c0_i32 = arith.constant 0 : i32
    %c0_i32_0 = arith.constant 0 : i32
    return %c0_i32, %arg0 : i32, i32
  }
  func.func @transform_2(%arg0: i32) -> (i32, i32) {
    %c0_i32 = arith.constant 0 : i32
    %c0_i32_0 = arith.constant 0 : i32
    %c0_i32_1 = arith.constant 0 : i32
    return %c0_i32, %c0_i32_0 : i32, i32
  }
  func.func @transform_3(%arg0: i32) -> (i32, i32) {
    %c0_i32 = arith.constant 0 : i32
    %c0_i32_0 = arith.constant 0 : i32
    %c0_i32_1 = arith.constant 0 : i32
    return %c0_i32, %c0_i32_0 : i32, i32
  }
  func.func @transform_4(%arg0: i32) -> (i32, i32) {
    %c0_i32 = arith.constant 0 : i32
    %c0_i32_0 = arith.constant 0 : i32
    %c0_i32_1 = arith.constant 0 : i32
    return %c0_i32, %c0_i32_0 : i32, i32
  }
  func.func @transform_5(%arg0: i32) -> (i32, i32) {
    %c0_i32 = arith.constant 0 : i32
    %c0_i32_0 = arith.constant 0 : i32
    %c0_i32_1 = arith.constant 0 : i32
    return %c0_i32, %c0_i32_0 : i32, i32
  }
  func.func @transform_6(%arg0: i32) -> (i32, i32) {
    %c0_i32 = arith.constant 0 : i32
    %c0_i32_0 = arith.constant 0 : i32
    %c0_i32_1 = arith.constant 0 : i32
    return %c0_i32, %c0_i32_0 : i32, i32
  }
  func.func @transform_7(%arg0: i32) -> (i32, i32) {
    %c0_i32 = arith.constant 0 : i32
    %c0_i32_0 = arith.constant 0 : i32
    %c0_i32_1 = arith.constant 0 : i32
    return %c0_i32, %c0_i32_0 : i32, i32
  }
  func.func @transform_8(%arg0: i32) -> (i32, i32) {
    %c0_i32 = arith.constant 0 : i32
    %c0_i32_0 = arith.constant 0 : i32
    %c0_i32_1 = arith.constant 0 : i32
    return %c0_i32, %c0_i32_0 : i32, i32
  }
  func.func @transform_9(%arg0: i32) -> (i32, i32) {
    %c0_i32 = arith.constant 0 : i32
    %c0_i32_0 = arith.constant 0 : i32
    %c0_i32_1 = arith.constant 0 : i32
    return %c0_i32, %c0_i32_0 : i32, i32
  }
  func.func @transform_10(%arg0: i32) -> (i32, i32) {
    %c0_i32 = arith.constant 0 : i32
    %c0_i32_0 = arith.constant 0 : i32
    %c0_i32_1 = arith.constant 0 : i32
    return %c0_i32, %c0_i32_0 : i32, i32
  }
  func.func @transform_11(%arg0: i32) -> (i32, i32) {
    %c0_i32 = arith.constant 0 : i32
    %c0_i32_0 = arith.constant 0 : i32
    %c0_i32_1 = arith.constant 0 : i32
    return %c0_i32, %c0_i32_0 : i32, i32
  }
  func.func @transform_12(%arg0: i32) -> (i32, i32) {
    %c0_i32 = arith.constant 0 : i32
    %c0_i32_0 = arith.constant 0 : i32
    %c0_i32_1 = arith.constant 0 : i32
    return %c0_i32, %c0_i32_0 : i32, i32
  }
  func.func @transform_13(%arg0: i32) -> (i32, i32) {
    %c0_i32 = arith.constant 0 : i32
    %c0_i32_0 = arith.constant 0 : i32
    %c0_i32_1 = arith.constant 0 : i32
    return %c0_i32, %c0_i32_0 : i32, i32
  }
  func.func @transform_14(%arg0: i32) -> (i32, i32) {
    %c0_i32 = arith.constant 0 : i32
    %c0_i32_0 = arith.constant 0 : i32
    %c0_i32_1 = arith.constant 0 : i32
    return %c0_i32, %c0_i32_0 : i32, i32
  }
  func.func @transform_15(%arg0: i32) -> (i32, i32) {
    %c0_i32 = arith.constant 0 : i32
    %c0_i32_0 = arith.constant 0 : i32
    %c0_i32_1 = arith.constant 0 : i32
    return %c0_i32, %c0_i32_0 : i32, i32
  }
  func.func @transform_16(%arg0: i32) -> (i32, i32) {
    %c0_i32 = arith.constant 0 : i32
    %c0_i32_0 = arith.constant 0 : i32
    %c0_i32_1 = arith.constant 0 : i32
    return %c0_i32, %c0_i32_0 : i32, i32
  }
  func.func @transform_17(%arg0: i32) -> (i32, i32) {
    %c0_i32 = arith.constant 0 : i32
    %c0_i32_0 = arith.constant 0 : i32
    %c0_i32_1 = arith.constant 0 : i32
    return %c0_i32, %c0_i32_0 : i32, i32
  }
  func.func @transform_18(%arg0: i32) -> (i32, i32) {
    %c0_i32 = arith.constant 0 : i32
    %c0_i32_0 = arith.constant 0 : i32
    %c0_i32_1 = arith.constant 0 : i32
    return %c0_i32, %c0_i32_0 : i32, i32
  }
  func.func @transform_19(%arg0: i32) -> (i32, i32) {
    %c0_i32 = arith.constant 0 : i32
    %c0_i32_0 = arith.constant 0 : i32
    return %c0_i32, %arg0 : i32, i32
  }
}

</mosaic_0001>

<llo_original>
// kernel: tpu_custom_call.1
$region0: #{tpu_custom_call.1}
  #allocation0 [shape = 'u32[]', space=smem, size = 0x4, offset = 0x4, fixed_abs, tag = 'smem constant byte address 0x4 - core index']
  #allocation1 [shape = 'u32[144,128]{1,0:T(1,128)}', space=vmem, size = 0x12000, scoped, tag = 'internal scratch']
  %s0 = inlined_call_operand.vmem [shape: bf16[48,40], index: 0, kind: input, shape index: {}]
  %s1 = inlined_call_operand.vmem [shape: bf16[8,40], index: 1, kind: input, shape index: {}]
  %s2 = inlined_call_operand.vmem [shape: bf16[16,48], index: 2, kind: input, shape index: {}]
  %s3 = inlined_call_operand.vmem [shape: f32[16,1], index: 3, kind: input, shape index: {}]
  %s4 = inlined_call_operand.vmem [shape: bf16[8,16], index: 4, kind: input, shape index: {}]
  %s5 = inlined_call_operand.vmem [shape: f32[8,1], index: 5, kind: input, shape index: {}]
  %s6 = inlined_call_operand.vmem [shape: bf16[32,8], index: 6, kind: input, shape index: {}]
  %s7 = inlined_call_operand.vmem [shape: f32[32,1], index: 7, kind: input, shape index: {}]
  %s8 = inlined_call_operand.vmem [shape: bf16[16,8], index: 8, kind: input, shape index: {}]
  %s9 = inlined_call_operand.vmem [shape: f32[16,1], index: 9, kind: input, shape index: {}]
  %s10 = inlined_call_operand.vmem [shape: bf16[32,16], index: 10, kind: input, shape index: {}]
  %s11 = inlined_call_operand.vmem [shape: f32[32,1], index: 11, kind: input, shape index: {}]
  %s12 = inlined_call_operand.vmem [shape: bf16[8,32], index: 12, kind: input, shape index: {}]
  %s13 = inlined_call_operand.vmem [shape: bf16[8,32], index: 13, kind: input, shape index: {}]
  %s14 = inlined_call_operand.vmem [shape: f32[8,1], index: 14, kind: input, shape index: {}]
  %s15 = inlined_call_operand.vmem [shape: bf16[16,8], index: 15, kind: input, shape index: {}]
  %s16 = inlined_call_operand.vmem [shape: f32[16,1], index: 16, kind: input, shape index: {}]
  %s17 = inlined_call_operand.vmem [shape: bf16[48,16], index: 17, kind: input, shape index: {}]
  %s18 = inlined_call_operand.vmem [shape: f32[48,1], index: 18, kind: input, shape index: {}]
  %s19 = inlined_call_operand.vmem [shape: f32[48,40], index: 19, kind: output, shape index: {}]
  %s20 = sld [smem:[#allocation0]]
  $region86: #{tpu_custom_call.1} parent=0
    _
  %s22 = ssub.s32 1, %s20
  %s23 = scalar_select 0, %s22, %s20
  // Predicated region
  $region2: #{tpu_custom_call.1} parent=0 // pred_check
    _
  $region3: #{tpu_custom_call.1} parent=0 // pred_check_branch
    %25 = sbr.rel (0) target = $region5
  $region4: #{tpu_custom_call.1} parent=0 // pred_region
    _
  $region5: #{tpu_custom_call.1} parent=0 // pred_fallthru
    _
  // Predicated region
  $region6: #{tpu_custom_call.1} parent=0 // pred_check
    _
  $region7: #{tpu_custom_call.1} parent=0 // pred_check_branch
    %27 = sbr.rel (0) target = $region9
  $region8: #{tpu_custom_call.1} parent=0 // pred_region
    _
  $region9: #{tpu_custom_call.1} parent=0 // pred_fallthru
    _
  // Predicated region
  $region10: #{tpu_custom_call.1} parent=0 // pred_check
    _
  $region11: #{tpu_custom_call.1} parent=0 // pred_check_branch
    %29 = sbr.rel (0) target = $region13
  $region12: #{tpu_custom_call.1} parent=0 // pred_region
    _
  $region13: #{tpu_custom_call.1} parent=0 // pred_fallthru
    _
  // Predicated region
  $region14: #{tpu_custom_call.1} parent=0 // pred_check
    _
  $region15: #{tpu_custom_call.1} parent=0 // pred_check_branch
    %31 = sbr.rel (0) target = $region17
  $region16: #{tpu_custom_call.1} parent=0 // pred_region
    _
  $region17: #{tpu_custom_call.1} parent=0 // pred_fallthru
    _
  // Predicated region
  $region18: #{tpu_custom_call.1} parent=0 // pred_check
    _
  $region19: #{tpu_custom_call.1} parent=0 // pred_check_branch
    %33 = sbr.rel (0) target = $region21
  $region20: #{tpu_custom_call.1} parent=0 // pred_region
    _
  $region21: #{tpu_custom_call.1} parent=0 // pred_fallthru
    _
  // Predicated region
  $region22: #{tpu_custom_call.1} parent=0 // pred_check
    _
  $region23: #{tpu_custom_call.1} parent=0 // pred_check_branch
    %35 = sbr.rel (0) target = $region25
  $region24: #{tpu_custom_call.1} parent=0 // pred_region
    _
  $region25: #{tpu_custom_call.1} parent=0 // pred_fallthru
    _
  // Predicated region
  $region26: #{tpu_custom_call.1} parent=0 // pred_check
    _
  $region27: #{tpu_custom_call.1} parent=0 // pred_check_branch
    %37 = sbr.rel (0) target = $region29
  $region28: #{tpu_custom_call.1} parent=0 // pred_region
    _
  $region29: #{tpu_custom_call.1} parent=0 // pred_fallthru
    _
  // Predicated region
  $region30: #{tpu_custom_call.1} parent=0 // pred_check
    _
  $region31: #{tpu_custom_call.1} parent=0 // pred_check_branch
    %39 = sbr.rel (0) target = $region33
  $region32: #{tpu_custom_call.1} parent=0 // pred_region
    _
  $region33: #{tpu_custom_call.1} parent=0 // pred_fallthru
    _
  // Predicated region
  $region34: #{tpu_custom_call.1} parent=0 // pred_check
    _
  $region35: #{tpu_custom_call.1} parent=0 // pred_check_branch
    %41 = sbr.rel (0) target = $region37
  $region36: #{tpu_custom_call.1} parent=0 // pred_region
    _
  $region37: #{tpu_custom_call.1} parent=0 // pred_fallthru
    _
  // Predicated region
  $region38: #{tpu_custom_call.1} parent=0 // pred_check
    _
  $region39: #{tpu_custom_call.1} parent=0 // pred_check_branch
    %43 = sbr.rel (0) target = $region41
  $region40: #{tpu_custom_call.1} parent=0 // pred_region
    _
  $region41: #{tpu_custom_call.1} parent=0 // pred_fallthru
    _
  // Predicated region
  $region42: #{tpu_custom_call.1} parent=0 // pred_check
    _
  $region43: #{tpu_custom_call.1} parent=0 // pred_check_branch
    %45 = sbr.rel (0) target = $region45
  $region44: #{tpu_custom_call.1} parent=0 // pred_region
    _
  $region45: #{tpu_custom_call.1} parent=0 // pred_fallthru
    _
  // Predicated region
  $region46: #{tpu_custom_call.1} parent=0 // pred_check
    _
  $region47: #{tpu_custom_call.1} parent=0 // pred_check_branch
    %47 = sbr.rel (0) target = $region49
  $region48: #{tpu_custom_call.1} parent=0 // pred_region
    _
  $region49: #{tpu_custom_call.1} parent=0 // pred_fallthru
    _
  // Predicated region
  $region50: #{tpu_custom_call.1} parent=0 // pred_check
    _
  $region51: #{tpu_custom_call.1} parent=0 // pred_check_branch
    %49 = sbr.rel (0) target = $region53
  $region52: #{tpu_custom_call.1} parent=0 // pred_region
    _
  $region53: #{tpu_custom_call.1} parent=0 // pred_fallthru
    _
  // Predicated region
  $region54: #{tpu_custom_call.1} parent=0 // pred_check
    _
  $region55: #{tpu_custom_call.1} parent=0 // pred_check_branch
    %51 = sbr.rel (0) target = $region57
  $region56: #{tpu_custom_call.1} parent=0 // pred_region
    _
  $region57: #{tpu_custom_call.1} parent=0 // pred_fallthru
    _
  // Predicated region
  $region58: #{tpu_custom_call.1} parent=0 // pred_check
    _
  $region59: #{tpu_custom_call.1} parent=0 // pred_check_branch
    %53 = sbr.rel (0) target = $region61
  $region60: #{tpu_custom_call.1} parent=0 // pred_region
    _
  $region61: #{tpu_custom_call.1} parent=0 // pred_fallthru
    _
  // Predicated region
  $region62: #{tpu_custom_call.1} parent=0 // pred_check
    _
  $region63: #{tpu_custom_call.1} parent=0 // pred_check_branch
    %55 = sbr.rel (0) target = $region65
  $region64: #{tpu_custom_call.1} parent=0 // pred_region
    _
  $region65: #{tpu_custom_call.1} parent=0 // pred_fallthru
    _
  // Predicated region
  $region66: #{tpu_custom_call.1} parent=0 // pred_check
    _
  $region67: #{tpu_custom_call.1} parent=0 // pred_check_branch
    %57 = sbr.rel (0) target = $region69
  $region68: #{tpu_custom_call.1} parent=0 // pred_region
    _
  $region69: #{tpu_custom_call.1} parent=0 // pred_fallthru
    _
  // Predicated region
  $region70: #{tpu_custom_call.1} parent=0 // pred_check
    _
  $region71: #{tpu_custom_call.1} parent=0 // pred_check_branch
    %59 = sbr.rel (0) target = $region73
  $region72: #{tpu_custom_call.1} parent=0 // pred_region
    _
  $region73: #{tpu_custom_call.1} parent=0 // pred_fallthru
    _
  // Predicated region
  $region74: #{tpu_custom_call.1} parent=0 // pred_check
    _
  $region75: #{tpu_custom_call.1} parent=0 // pred_check_branch
    %61 = sbr.rel (0) target = $region77
  $region76: #{tpu_custom_call.1} parent=0 // pred_region
    _
  $region77: #{tpu_custom_call.1} parent=0 // pred_fallthru
    _
  %v63 = vld [vmem:[%s0] sm:$0xf]
  %v64 = vld [vmem:[%s0 + $0x4] sm:$0xf]
  %v65 = vld [vmem:[%s0 + $0x8] sm:$0xf]
  %v66 = vld [vmem:[%s0 + $0xc] sm:$0xf]
  %v67 = vld [vmem:[%s0 + $0x10] sm:$0xf]
  %v68 = vld [vmem:[%s0 + $0x14] sm:$0xf]
  %v69 = vld [vmem:[%s2] sm:$0xf]
  %v70 = vld [vmem:[%s2 + $0x4] sm:$0xf]
  %v71 = vld [vmem:[%s3] sm:$0xff]
  %v72 = vld [vmem:[%s3 + $0x8] sm:$0xff]
  %74 = vset.pattern.permute.xlu0 0
  %75 = vperm.xlu0 %74, %v71
  %v76 = vpop.permute.xlu0 %75
  %79 = vset.pattern.permute.xlu0 0
  %80 = vperm.xlu0 %79, %v72
  %v81 = vpop.permute.xlu0 %80
  %v85 = vunpack.c.l.b16 %v69
  %v86 = vunpack.c.l.b16 %v70
  %v87 = vpack.c.b16 %v86, %v85
  %v94 = vunpack.c.l.b16 %v63
  %v95 = vunpack.c.l.b16 %v64
  %v96 = vunpack.c.l.b16 %v65
  %v97 = vunpack.c.l.b16 %v66
  %v98 = vunpack.c.l.b16 %v67
  %v99 = vunpack.c.l.b16 %v68
  %v100 = vpack.c.b16 %v95, %v94
  %v101 = vpack.c.b16 %v97, %v96
  %v102 = vpack.c.b16 %v99, %v98
  %vm106 = vcmask 392192
  %v108 = vsel %vm106, %v87, 0
  %110 = vmatprep.subr.bf16.mxu0 0
  %111 = vmatpush1.bf16.msra.mxu0 %v100
  %112 = vmatprep.subr.bf16.mxu0 0
  %113 = vmatpush1.bf16.msra.mxu0 %v101
  %114 = vmatprep.subr.bf16.mxu0 0
  %115 = vmatpush1.bf16.msra.mxu0 %v102
  %116 = vmatprep.subr.bf16.mxu0 0
  %117 = vmatpush1.bf16.msra.mxu0 0
  %118 = vmatprep.subr.bf16.mxu0 0
  %119 = vmatpush1.bf16.msra.mxu0 0
  %120 = vmatprep.subr.bf16.mxu0 0
  %121 = vmatpush1.bf16.msra.mxu0 0
  %122 = vmatprep.subr.bf16.mxu0 0
  %123 = vmatpush1.bf16.msra.mxu0 0
  %124 = vmatprep.subr.bf16.mxu0 0
  %125 = vmatpush1.bf16.msra.mxu0 0
  %126 = vmatprep.subr.bf16.mxu0 0
  %127 = vmatpush1.bf16.msra.mxu0 0
  %128 = vmatprep.subr.bf16.mxu0 0
  %129 = vmatpush1.bf16.msra.mxu0 0
  %130 = vmatprep.subr.bf16.mxu0 0
  %131 = vmatpush1.bf16.msra.mxu0 0
  %132 = vmatprep.subr.bf16.mxu0 0
  %133 = vmatpush1.bf16.msra.mxu0 0
  %134 = vmatprep.subr.bf16.mxu0 0
  %135 = vmatpush1.bf16.msra.mxu0 0
  %136 = vmatprep.subr.bf16.mxu0 0
  %137 = vmatpush1.bf16.msra.mxu0 0
  %138 = vmatprep.subr.bf16.mxu0 0
  %139 = vmatpush1.bf16.msra.mxu0 0
  %140 = vmatprep.subr.bf16.mxu0 0
  %141 = vmatpush1.bf16.msra.mxu0 0
  %142 = vmatprep.mubr.bf16.mxu0 0
  %143 = vmatmul.mubr.bf16.gmra.mrb[0].mxu0 %v108
  %v144 = vpop.f32.mrb[0].mxu0
  %v145 = vadd.f32 %v76, %v144
  %v146 = vpop.f32.mrb[0].mxu0
  %v147 = vpop.f32.mrb[0].mxu0
  %v148 = vadd.f32 %v81, %v147
  %v149 = vpop.f32.mrb[0].mxu0
  %150 = vdwg.mxu0
  %v151 = vmax.f32 %v145, 0.0
  %v152 = vmax.f32 %v148, 0.0
  %v153 = vpack.c.bf16 %v152, %v151
  %v154 = vld [vmem:[%s4] sm:$0xf]
  %v155 = vld [vmem:[%s5] sm:$0xff]
  %157 = vset.pattern.permute.xlu0 0
  %158 = vperm.xlu0 %157, %v155
  %v159 = vpop.permute.xlu0 %158
  %vm161 = vcmask 130048
  %v163 = vsel %vm161, %v154, 0
  %165 = vmatprep.subr.bf16.mxu0 0
  %166 = vmatpush1.bf16.msra.mxu0 %v153
  %167 = vmatprep.subr.bf16.mxu0 0
  %168 = vmatpush1.bf16.msra.mxu0 0
  %169 = vmatprep.subr.bf16.mxu0 0
  %170 = vmatpush1.bf16.msra.mxu0 0
  %171 = vmatprep.subr.bf16.mxu0 0
  %172 = vmatpush1.bf16.msra.mxu0 0
  %173 = vmatprep.subr.bf16.mxu0 0
  %174 = vmatpush1.bf16.msra.mxu0 0
  %175 = vmatprep.subr.bf16.mxu0 0
  %176 = vmatpush1.bf16.msra.mxu0 0
  %177 = vmatprep.subr.bf16.mxu0 0
  %178 = vmatpush1.bf16.msra.mxu0 0
  %179 = vmatprep.subr.bf16.mxu0 0
  %180 = vmatpush1.bf16.msra.mxu0 0
  %181 = vmatprep.subr.bf16.mxu0 0
  %182 = vmatpush1.bf16.msra.mxu0 0
  %183 = vmatprep.subr.bf16.mxu0 0
  %184 = vmatpush1.bf16.msra.mxu0 0
  %185 = vmatprep.subr.bf16.mxu0 0
  %186 = vmatpush1.bf16.msra.mxu0 0
  %187 = vmatprep.subr.bf16.mxu0 0
  %188 = vmatpush1.bf16.msra.mxu0 0
  %189 = vmatprep.subr.bf16.mxu0 0
  %190 = vmatpush1.bf16.msra.mxu0 0
  %191 = vmatprep.subr.bf16.mxu0 0
  %192 = vmatpush1.bf16.msra.mxu0 0
  %193 = vmatprep.subr.bf16.mxu0 0
  %194 = vmatpush1.bf16.msra.mxu0 0
  %195 = vmatprep.subr.bf16.mxu0 0
  %196 = vmatpush1.bf16.msra.mxu0 0
  %197 = vmatprep.mubr.bf16.mxu0 0
  %198 = vmatmul.mubr.bf16.gmra.mrb[0].mxu0 %v163
  %v199 = vpop.f32.mrb[0].mxu0
  %v200 = vadd.f32 %v159, %v199
  %v201 = vpop.f32.mrb[0].mxu0
  %v202 = vpop.f32.mrb[0].mxu0
  %v203 = vpop.f32.mrb[0].mxu0
  %204 = vdwg.mxu0
  %v205 = vmax.f32 %v200, 0.0
  %v206 = vpack.c.bf16 %v205, %v205
  %v207 = vld [vmem:[%s6] sm:$0xf]
  %v208 = vld [vmem:[%s6 + $0x4] sm:$0xf]
  %v209 = vld [vmem:[%s6 + $0x8] sm:$0xf]
  %v210 = vld [vmem:[%s6 + $0xc] sm:$0xf]
  %v211 = vld [vmem:[%s7] sm:$0xff]
  %v212 = vld [vmem:[%s7 + $0x8] sm:$0xff]
  %v213 = vld [vmem:[%s7 + $0x10] sm:$0xff]
  %v214 = vld [vmem:[%s7 + $0x18] sm:$0xff]
  %216 = vset.pattern.permute.xlu0 0
  %217 = vperm.xlu0 %216, %v211
  %v218 = vpop.permute.xlu0 %217
  %221 = vset.pattern.permute.xlu0 0
  %222 = vperm.xlu0 %221, %v212
  %v223 = vpop.permute.xlu0 %222
  %226 = vset.pattern.permute.xlu0 0
  %227 = vperm.xlu0 %226, %v213
  %v228 = vpop.permute.xlu0 %227
  %231 = vset.pattern.permute.xlu0 0
  %232 = vperm.xlu0 %231, %v214
  %v233 = vpop.permute.xlu0 %232
  %v239 = vunpack.c.l.b16 %v207
  %v240 = vunpack.c.l.b16 %v208
  %v241 = vunpack.c.l.b16 %v209
  %v242 = vunpack.c.l.b16 %v210
  %v243 = vpack.c.b16 %v240, %v239
  %v244 = vpack.c.b16 %v242, %v241
  %vm245 = vcmask 64512
  %v247 = vsel %vm245, %v243, 0
  %v250 = vsel %vm245, %v244, 0
  %vm252 = vcmask 1043456
  %v254 = vsel %vm252, %v206, 0
  %256 = vmatprep.subr.bf16.mxu0 0
  %257 = vmatpush1.bf16.msra.mxu0 %v254
  %258 = vmatprep.subr.bf16.mxu0 0
  %259 = vmatpush1.bf16.msra.mxu0 0
  %260 = vmatprep.subr.bf16.mxu0 0
  %261 = vmatpush1.bf16.msra.mxu0 0
  %262 = vmatprep.subr.bf16.mxu0 0
  %263 = vmatpush1.bf16.msra.mxu0 0
  %264 = vmatprep.subr.bf16.mxu0 0
  %265 = vmatpush1.bf16.msra.mxu0 0
  %266 = vmatprep.subr.bf16.mxu0 0
  %267 = vmatpush1.bf16.msra.mxu0 0
  %268 = vmatprep.subr.bf16.mxu0 0
  %269 = vmatpush1.bf16.msra.mxu0 0
  %270 = vmatprep.subr.bf16.mxu0 0
  %271 = vmatpush1.bf16.msra.mxu0 0
  %272 = vmatprep.subr.bf16.mxu0 0
  %273 = vmatpush1.bf16.msra.mxu0 0
  %274 = vmatprep.subr.bf16.mxu0 0
  %275 = vmatpush1.bf16.msra.mxu0 0
  %276 = vmatprep.subr.bf16.mxu0 0
  %277 = vmatpush1.bf16.msra.mxu0 0
  %278 = vmatprep.subr.bf16.mxu0 0
  %279 = vmatpush1.bf16.msra.mxu0 0
  %280 = vmatprep.subr.bf16.mxu0 0
  %281 = vmatpush1.bf16.msra.mxu0 0
  %282 = vmatprep.subr.bf16.mxu0 0
  %283 = vmatpush1.bf16.msra.mxu0 0
  %284 = vmatprep.subr.bf16.mxu0 0
  %285 = vmatpush1.bf16.msra.mxu0 0
  %286 = vmatprep.subr.bf16.mxu0 0
  %287 = vmatpush1.bf16.msra.mxu0 0
  %288 = vmatprep.mubr.bf16.mxu0 0
  %289 = vmatmul.mubr.bf16.gmra.mrb[0].mxu0 %v247
  %v290 = vpop.f32.mrb[0].mxu0
  %v291 = vadd.f32 %v218, %v290
  %v292 = vpop.f32.mrb[0].mxu0
  %v293 = vpop.f32.mrb[0].mxu0
  %v294 = vadd.f32 %v223, %v293
  %v295 = vpop.f32.mrb[0].mxu0
  %296 = vmatprep.mubr.bf16.mxu0 0
  %297 = vmatmul.mubr.bf16.gmra.mrb[0].mxu0 %v250
  %v298 = vpop.f32.mrb[0].mxu0
  %v299 = vadd.f32 %v228, %v298
  %v300 = vpop.f32.mrb[0].mxu0
  %v301 = vpop.f32.mrb[0].mxu0
  %v302 = vadd.f32 %v233, %v301
  %v303 = vpop.f32.mrb[0].mxu0
  %304 = vdwg.mxu0
  %v305 = vpack.c.bf16 %v294, %v291
  %v306 = vpack.c.bf16 %v302, %v299
  %v307 = vld [vmem:[%s1] sm:$0xf]
  %v308 = vld [vmem:[%s8] sm:$0xf]
  %v309 = vld [vmem:[%s8 + $0x4] sm:$0xf]
  %v310 = vld [vmem:[%s9] sm:$0xff]
  %v311 = vld [vmem:[%s9 + $0x8] sm:$0xff]
  %313 = vset.pattern.permute.xlu0 0
  %314 = vperm.xlu0 %313, %v310
  %v315 = vpop.permute.xlu0 %314
  %318 = vset.pattern.permute.xlu0 0
  %319 = vperm.xlu0 %318, %v311
  %v320 = vpop.permute.xlu0 %319
  %v324 = vunpack.c.l.b16 %v308
  %v325 = vunpack.c.l.b16 %v309
  %v326 = vpack.c.b16 %v325, %v324
  %v328 = vsel %vm245, %v326, 0
  %v331 = vsel %vm252, %v307, 0
  %333 = vmatprep.subr.bf16.mxu0 0
  %334 = vmatpush1.bf16.msra.mxu0 %v331
  %335 = vmatprep.subr.bf16.mxu0 0
  %336 = vmatpush1.bf16.msra.mxu0 0
  %337 = vmatprep.subr.bf16.mxu0 0
  %338 = vmatpush1.bf16.msra.mxu0 0
  %339 = vmatprep.subr.bf16.mxu0 0
  %340 = vmatpush1.bf16.msra.mxu0 0
  %341 = vmatprep.subr.bf16.mxu0 0
  %342 = vmatpush1.bf16.msra.mxu0 0
  %343 = vmatprep.subr.bf16.mxu0 0
  %344 = vmatpush1.bf16.msra.mxu0 0
  %345 = vmatprep.subr.bf16.mxu0 0
  %346 = vmatpush1.bf16.msra.mxu0 0
  %347 = vmatprep.subr.bf16.mxu0 0
  %348 = vmatpush1.bf16.msra.mxu0 0
  %349 = vmatprep.subr.bf16.mxu0 0
  %350 = vmatpush1.bf16.msra.mxu0 0
  %351 = vmatprep.subr.bf16.mxu0 0
  %352 = vmatpush1.bf16.msra.mxu0 0
  %353 = vmatprep.subr.bf16.mxu0 0
  %354 = vmatpush1.bf16.msra.mxu0 0
  %355 = vmatprep.subr.bf16.mxu0 0
  %356 = vmatpush1.bf16.msra.mxu0 0
  %357 = vmatprep.subr.bf16.mxu0 0
  %358 = vmatpush1.bf16.msra.mxu0 0
  %359 = vmatprep.subr.bf16.mxu0 0
  %360 = vmatpush1.bf16.msra.mxu0 0
  %361 = vmatprep.subr.bf16.mxu0 0
  %362 = vmatpush1.bf16.msra.mxu0 0
  %363 = vmatprep.subr.bf16.mxu0 0
  %364 = vmatpush1.bf16.msra.mxu0 0
  %365 = vmatprep.mubr.bf16.mxu0 0
  %366 = vmatmul.mubr.bf16.gmra.mrb[0].mxu0 %v328
  %v367 = vpop.f32.mrb[0].mxu0
  %v368 = vadd.f32 %v315, %v367
  %v369 = vpop.f32.mrb[0].mxu0
  %v370 = vpop.f32.mrb[0].mxu0
  %v371 = vadd.f32 %v320, %v370
  %v372 = vpop.f32.mrb[0].mxu0
  %373 = vdwg.mxu0
  %v374 = vmax.f32 %v368, 0.0
  %v375 = vmax.f32 %v371, 0.0
  %v376 = vpack.c.bf16 %v375, %v374
  %v377 = vld [vmem:[%s10] sm:$0xf]
  %v378 = vld [vmem:[%s10 + $0x4] sm:$0xf]
  %v379 = vld [vmem:[%s10 + $0x8] sm:$0xf]
  %v380 = vld [vmem:[%s10 + $0xc] sm:$0xf]
  %v381 = vld [vmem:[%s11] sm:$0xff]
  %v382 = vld [vmem:[%s11 + $0x8] sm:$0xff]
  %v383 = vld [vmem:[%s11 + $0x10] sm:$0xff]
  %v384 = vld [vmem:[%s11 + $0x18] sm:$0xff]
  %386 = vset.pattern.permute.xlu0 0
  %387 = vperm.xlu0 %386, %v381
  %v388 = vpop.permute.xlu0 %387
  %391 = vset.pattern.permute.xlu0 0
  %392 = vperm.xlu0 %391, %v382
  %v393 = vpop.permute.xlu0 %392
  %396 = vset.pattern.permute.xlu0 0
  %397 = vperm.xlu0 %396, %v383
  %v398 = vpop.permute.xlu0 %397
  %401 = vset.pattern.permute.xlu0 0
  %402 = vperm.xlu0 %401, %v384
  %v403 = vpop.permute.xlu0 %402
  %v409 = vunpack.c.l.b16 %v377
  %v410 = vunpack.c.l.b16 %v378
  %v411 = vunpack.c.l.b16 %v379
  %v412 = vunpack.c.l.b16 %v380
  %v413 = vpack.c.b16 %v410, %v409
  %v414 = vpack.c.b16 %v412, %v411
  %v416 = vsel %vm161, %v413, 0
  %v419 = vsel %vm161, %v414, 0
  %421 = vmatprep.subr.bf16.mxu0 0
  %422 = vmatpush1.bf16.msra.mxu0 %v376
  %423 = vmatprep.subr.bf16.mxu0 0
  %424 = vmatpush1.bf16.msra.mxu0 0
  %425 = vmatprep.subr.bf16.mxu0 0
  %426 = vmatpush1.bf16.msra.mxu0 0
  %427 = vmatprep.subr.bf16.mxu0 0
  %428 = vmatpush1.bf16.msra.mxu0 0
  %429 = vmatprep.subr.bf16.mxu0 0
  %430 = vmatpush1.bf16.msra.mxu0 0
  %431 = vmatprep.subr.bf16.mxu0 0
  %432 = vmatpush1.bf16.msra.mxu0 0
  %433 = vmatprep.subr.bf16.mxu0 0
  %434 = vmatpush1.bf16.msra.mxu0 0
  %435 = vmatprep.subr.bf16.mxu0 0
  %436 = vmatpush1.bf16.msra.mxu0 0
  %437 = vmatprep.subr.bf16.mxu0 0
  %438 = vmatpush1.bf16.msra.mxu0 0
  %439 = vmatprep.subr.bf16.mxu0 0
  %440 = vmatpush1.bf16.msra.mxu0 0
  %441 = vmatprep.subr.bf16.mxu0 0
  %442 = vmatpush1.bf16.msra.mxu0 0
  %443 = vmatprep.subr.bf16.mxu0 0
  %444 = vmatpush1.bf16.msra.mxu0 0
  %445 = vmatprep.subr.bf16.mxu0 0
  %446 = vmatpush1.bf16.msra.mxu0 0
  %447 = vmatprep.subr.bf16.mxu0 0
  %448 = vmatpush1.bf16.msra.mxu0 0
  %449 = vmatprep.subr.bf16.mxu0 0
  %450 = vmatpush1.bf16.msra.mxu0 0
  %451 = vmatprep.subr.bf16.mxu0 0
  %452 = vmatpush1.bf16.msra.mxu0 0
  %453 = vmatprep.mubr.bf16.mxu0 0
  %454 = vmatmul.mubr.bf16.gmra.mrb[0].mxu0 %v416
  %v455 = vpop.f32.mrb[0].mxu0
  %v456 = vadd.f32 %v388, %v455
  %v457 = vpop.f32.mrb[0].mxu0
  %v458 = vpop.f32.mrb[0].mxu0
  %v459 = vadd.f32 %v393, %v458
  %v460 = vpop.f32.mrb[0].mxu0
  %461 = vmatprep.mubr.bf16.mxu0 0
  %462 = vmatmul.mubr.bf16.gmra.mrb[0].mxu0 %v419
  %v463 = vpop.f32.mrb[0].mxu0
  %v464 = vadd.f32 %v398, %v463
  %v465 = vpop.f32.mrb[0].mxu0
  %v466 = vpop.f32.mrb[0].mxu0
  %v467 = vadd.f32 %v403, %v466
  %v468 = vpop.f32.mrb[0].mxu0
  %469 = vdwg.mxu0
  %v470 = vpack.c.bf16 %v459, %v456
  %v471 = vpack.c.bf16 %v467, %v464
  %v472 = vld [vmem:[%s12] sm:$0xf]
  %v473 = vld [vmem:[%s13] sm:$0xf]
  %vm474 = vcmask 261120
  %v476 = vsel %vm474, %v473, 0
  %478 = vmatprep.subr.bf16.mxu0 0
  %479 = vmatpush1.bf16.msra.mxu0 %v470
  %480 = vmatprep.subr.bf16.mxu0 0
  %481 = vmatpush1.bf16.msra.mxu0 %v471
  %482 = vmatprep.subr.bf16.mxu0 0
  %483 = vmatpush1.bf16.msra.mxu0 0
  %484 = vmatprep.subr.bf16.mxu0 0
  %485 = vmatpush1.bf16.msra.mxu0 0
  %486 = vmatprep.subr.bf16.mxu0 0
  %487 = vmatpush1.bf16.msra.mxu0 0
  %488 = vmatprep.subr.bf16.mxu0 0
  %489 = vmatpush1.bf16.msra.mxu0 0
  %490 = vmatprep.subr.bf16.mxu0 0
  %491 = vmatpush1.bf16.msra.mxu0 0
  %492 = vmatprep.subr.bf16.mxu0 0
  %493 = vmatpush1.bf16.msra.mxu0 0
  %494 = vmatprep.subr.bf16.mxu0 0
  %495 = vmatpush1.bf16.msra.mxu0 0
  %496 = vmatprep.subr.bf16.mxu0 0
  %497 = vmatpush1.bf16.msra.mxu0 0
  %498 = vmatprep.subr.bf16.mxu0 0
  %499 = vmatpush1.bf16.msra.mxu0 0
  %500 = vmatprep.subr.bf16.mxu0 0
  %501 = vmatpush1.bf16.msra.mxu0 0
  %502 = vmatprep.subr.bf16.mxu0 0
  %503 = vmatpush1.bf16.msra.mxu0 0
  %504 = vmatprep.subr.bf16.mxu0 0
  %505 = vmatpush1.bf16.msra.mxu0 0
  %506 = vmatprep.subr.bf16.mxu0 0
  %507 = vmatpush1.bf16.msra.mxu0 0
  %508 = vmatprep.subr.bf16.mxu0 0
  %509 = vmatpush1.bf16.msra.mxu0 0
  %510 = vmatprep.mubr.bf16.mxu0 0
  %511 = vmatmul.mubr.bf16.gmra.mrb[0].mxu0 %v476
  %v512 = vpop.f32.mrb[0].mxu0
  %v513 = vadd.f32 0.0, %v512
  %v514 = vpop.f32.mrb[0].mxu0
  %v515 = vpop.f32.mrb[0].mxu0
  %v516 = vpop.f32.mrb[0].mxu0
  %517 = vdwg.mxu0
  %v519 = vsel %vm474, %v472, 0
  %521 = vmatprep.subr.bf16.mxu0 0
  %522 = vmatpush1.bf16.msra.mxu0 %v305
  %523 = vmatprep.subr.bf16.mxu0 0
  %524 = vmatpush1.bf16.msra.mxu0 %v306
  %525 = vmatprep.subr.bf16.mxu0 0
  %526 = vmatpush1.bf16.msra.mxu0 0
  %527 = vmatprep.subr.bf16.mxu0 0
  %528 = vmatpush1.bf16.msra.mxu0 0
  %529 = vmatprep.subr.bf16.mxu0 0
  %530 = vmatpush1.bf16.msra.mxu0 0
  %531 = vmatprep.subr.bf16.mxu0 0
  %532 = vmatpush1.bf16.msra.mxu0 0
  %533 = vmatprep.subr.bf16.mxu0 0
  %534 = vmatpush1.bf16.msra.mxu0 0
  %535 = vmatprep.subr.bf16.mxu0 0
  %536 = vmatpush1.bf16.msra.mxu0 0
  %537 = vmatprep.subr.bf16.mxu0 0
  %538 = vmatpush1.bf16.msra.mxu0 0
  %539 = vmatprep.subr.bf16.mxu0 0
  %540 = vmatpush1.bf16.msra.mxu0 0
  %541 = vmatprep.subr.bf16.mxu0 0
  %542 = vmatpush1.bf16.msra.mxu0 0
  %543 = vmatprep.subr.bf16.mxu0 0
  %544 = vmatpush1.bf16.msra.mxu0 0
  %545 = vmatprep.subr.bf16.mxu0 0
  %546 = vmatpush1.bf16.msra.mxu0 0
  %547 = vmatprep.subr.bf16.mxu0 0
  %548 = vmatpush1.bf16.msra.mxu0 0
  %549 = vmatprep.subr.bf16.mxu0 0
  %550 = vmatpush1.bf16.msra.mxu0 0
  %551 = vmatprep.subr.bf16.mxu0 0
  %552 = vmatpush1.bf16.msra.mxu0 0
  %553 = vmatprep.mubr.bf16.mxu0 0
  %554 = vmatmul.mubr.bf16.gmra.mrb[0].mxu0 %v519
  %v555 = vpop.f32.mrb[0].mxu0
  %v556 = vadd.f32 %v513, %v555
  %v557 = vpop.f32.mrb[0].mxu0
  %v558 = vpop.f32.mrb[0].mxu0
  %v559 = vpop.f32.mrb[0].mxu0
  %560 = vdwg.mxu0
  %v561 = vld [vmem:[%s14] sm:$0xff]
  %563 = vset.pattern.permute.xlu0 0
  %564 = vperm.xlu0 %563, %v561
  %v565 = vpop.permute.xlu0 %564
  %v567 = vadd.f32 %v556, %v565
  %v568 = vmax.f32 %v567, 0.0
  %v569 = vpack.c.bf16 %v568, %v568
  %v570 = vld [vmem:[%s15] sm:$0xf]
  %v571 = vld [vmem:[%s15 + $0x4] sm:$0xf]
  %v572 = vld [vmem:[%s16] sm:$0xff]
  %v573 = vld [vmem:[%s16 + $0x8] sm:$0xff]
  %575 = vset.pattern.permute.xlu0 0
  %576 = vperm.xlu0 %575, %v572
  %v577 = vpop.permute.xlu0 %576
  %580 = vset.pattern.permute.xlu0 0
  %581 = vperm.xlu0 %580, %v573
  %v582 = vpop.permute.xlu0 %581
  %v586 = vunpack.c.l.b16 %v570
  %v587 = vunpack.c.l.b16 %v571
  %v588 = vpack.c.b16 %v587, %v586
  %v590 = vsel %vm245, %v588, 0
  %v593 = vsel %vm252, %v569, 0
  %595 = vmatprep.subr.bf16.mxu0 0
  %596 = vmatpush1.bf16.msra.mxu0 %v593
  %597 = vmatprep.subr.bf16.mxu0 0
  %598 = vmatpush1.bf16.msra.mxu0 0
  %599 = vmatprep.subr.bf16.mxu0 0
  %600 = vmatpush1.bf16.msra.mxu0 0
  %601 = vmatprep.subr.bf16.mxu0 0
  %602 = vmatpush1.bf16.msra.mxu0 0
  %603 = vmatprep.subr.bf16.mxu0 0
  %604 = vmatpush1.bf16.msra.mxu0 0
  %605 = vmatprep.subr.bf16.mxu0 0
  %606 = vmatpush1.bf16.msra.mxu0 0
  %607 = vmatprep.subr.bf16.mxu0 0
  %608 = vmatpush1.bf16.msra.mxu0 0
  %609 = vmatprep.subr.bf16.mxu0 0
  %610 = vmatpush1.bf16.msra.mxu0 0
  %611 = vmatprep.subr.bf16.mxu0 0
  %612 = vmatpush1.bf16.msra.mxu0 0
  %613 = vmatprep.subr.bf16.mxu0 0
  %614 = vmatpush1.bf16.msra.mxu0 0
  %615 = vmatprep.subr.bf16.mxu0 0
  %616 = vmatpush1.bf16.msra.mxu0 0
  %617 = vmatprep.subr.bf16.mxu0 0
  %618 = vmatpush1.bf16.msra.mxu0 0
  %619 = vmatprep.subr.bf16.mxu0 0
  %620 = vmatpush1.bf16.msra.mxu0 0
  %621 = vmatprep.subr.bf16.mxu0 0
  %622 = vmatpush1.bf16.msra.mxu0 0
  %623 = vmatprep.subr.bf16.mxu0 0
  %624 = vmatpush1.bf16.msra.mxu0 0
  %625 = vmatprep.subr.bf16.mxu0 0
  %626 = vmatpush1.bf16.msra.mxu0 0
  %627 = vmatprep.mubr.bf16.mxu0 0
  %628 = vmatmul.mubr.bf16.gmra.mrb[0].mxu0 %v590
  %v629 = vpop.f32.mrb[0].mxu0
  %v630 = vadd.f32 %v577, %v629
  %v631 = vpop.f32.mrb[0].mxu0
  %v632 = vpop.f32.mrb[0].mxu0
  %v633 = vadd.f32 %v582, %v632
  %v634 = vpop.f32.mrb[0].mxu0
  %635 = vdwg.mxu0
  %v636 = vmax.f32 %v630, 0.0
  %v637 = vmax.f32 %v633, 0.0
  %v638 = vpack.c.bf16 %v637, %v636
  %v639 = vld [vmem:[%s17] sm:$0xf]
  %v640 = vld [vmem:[%s17 + $0x4] sm:$0xf]
  %v641 = vld [vmem:[%s17 + $0x8] sm:$0xf]
  %v642 = vld [vmem:[%s17 + $0xc] sm:$0xf]
  %v643 = vld [vmem:[%s17 + $0x10] sm:$0xf]
  %v644 = vld [vmem:[%s17 + $0x14] sm:$0xf]
  %v645 = vld [vmem:[%s18] sm:$0xff]
  %v646 = vld [vmem:[%s18 + $0x8] sm:$0xff]
  %v647 = vld [vmem:[%s18 + $0x10] sm:$0xff]
  %v648 = vld [vmem:[%s18 + $0x18] sm:$0xff]
  %v649 = vld [vmem:[%s18 + $0x20] sm:$0xff]
  %v650 = vld [vmem:[%s18 + $0x28] sm:$0xff]
  %652 = vset.pattern.permute.xlu0 0
  %653 = vperm.xlu0 %652, %v645
  %v654 = vpop.permute.xlu0 %653
  %657 = vset.pattern.permute.xlu0 0
  %658 = vperm.xlu0 %657, %v646
  %v659 = vpop.permute.xlu0 %658
  %662 = vset.pattern.permute.xlu0 0
  %663 = vperm.xlu0 %662, %v647
  %v664 = vpop.permute.xlu0 %663
  %667 = vset.pattern.permute.xlu0 0
  %668 = vperm.xlu0 %667, %v648
  %v669 = vpop.permute.xlu0 %668
  %672 = vset.pattern.permute.xlu0 0
  %673 = vperm.xlu0 %672, %v649
  %v674 = vpop.permute.xlu0 %673
  %677 = vset.pattern.permute.xlu0 0
  %678 = vperm.xlu0 %677, %v650
  %v679 = vpop.permute.xlu0 %678
  %v687 = vunpack.c.l.b16 %v639
  %v688 = vunpack.c.l.b16 %v640
  %v689 = vunpack.c.l.b16 %v641
  %v690 = vunpack.c.l.b16 %v642
  %v691 = vunpack.c.l.b16 %v643
  %v692 = vunpack.c.l.b16 %v644
  %v693 = vpack.c.b16 %v688, %v687
  %v694 = vpack.c.b16 %v690, %v689
  %v695 = vpack.c.b16 %v692, %v691
  %v697 = vsel %vm161, %v693, 0
  %v700 = vsel %vm161, %v694, 0
  %v703 = vsel %vm161, %v695, 0
  %705 = vmatprep.subr.bf16.mxu0 0
  %706 = vmatpush1.bf16.msra.mxu0 %v638
  %707 = vmatprep.subr.bf16.mxu0 0
  %708 = vmatpush1.bf16.msra.mxu0 0
  %709 = vmatprep.subr.bf16.mxu0 0
  %710 = vmatpush1.bf16.msra.mxu0 0
  %711 = vmatprep.subr.bf16.mxu0 0
  %712 = vmatpush1.bf16.msra.mxu0 0
  %713 = vmatprep.subr.bf16.mxu0 0
  %714 = vmatpush1.bf16.msra.mxu0 0
  %715 = vmatprep.subr.bf16.mxu0 0
  %716 = vmatpush1.bf16.msra.mxu0 0
  %717 = vmatprep.subr.bf16.mxu0 0
  %718 = vmatpush1.bf16.msra.mxu0 0
  %719 = vmatprep.subr.bf16.mxu0 0
  %720 = vmatpush1.bf16.msra.mxu0 0
  %721 = vmatprep.subr.bf16.mxu0 0
  %722 = vmatpush1.bf16.msra.mxu0 0
  %723 = vmatprep.subr.bf16.mxu0 0
  %724 = vmatpush1.bf16.msra.mxu0 0
  %725 = vmatprep.subr.bf16.mxu0 0
  %726 = vmatpush1.bf16.msra.mxu0 0
  %727 = vmatprep.subr.bf16.mxu0 0
  %728 = vmatpush1.bf16.msra.mxu0 0
  %729 = vmatprep.subr.bf16.mxu0 0
  %730 = vmatpush1.bf16.msra.mxu0 0
  %731 = vmatprep.subr.bf16.mxu0 0
  %732 = vmatpush1.bf16.msra.mxu0 0
  %733 = vmatprep.subr.bf16.mxu0 0
  %734 = vmatpush1.bf16.msra.mxu0 0
  %735 = vmatprep.subr.bf16.mxu0 0
  %736 = vmatpush1.bf16.msra.mxu0 0
  %737 = vmatprep.mubr.bf16.mxu0 0
  %738 = vmatmul.mubr.bf16.gmra.mrb[0].mxu0 %v697
  %v739 = vpop.f32.mrb[0].mxu0
  %v740 = vadd.f32 %v654, %v739
  %v741 = vpop.f32.mrb[0].mxu0
  %v742 = vpop.f32.mrb[0].mxu0
  %v743 = vadd.f32 %v659, %v742
  %v744 = vpop.f32.mrb[0].mxu0
  %745 = vmatprep.mubr.bf16.mxu0 0
  %746 = vmatmul.mubr.bf16.gmra.mrb[0].mxu0 %v700
  %v747 = vpop.f32.mrb[0].mxu0
  %v748 = vadd.f32 %v664, %v747
  %v749 = vpop.f32.mrb[0].mxu0
  %v750 = vpop.f32.mrb[0].mxu0
  %v751 = vadd.f32 %v669, %v750
  %v752 = vpop.f32.mrb[0].mxu0
  %753 = vmatprep.mubr.bf16.mxu0 0
  %754 = vmatmul.mubr.bf16.gmra.mrb[0].mxu0 %v703
  %v755 = vpop.f32.mrb[0].mxu0
  %v756 = vadd.f32 %v674, %v755
  %v757 = vpop.f32.mrb[0].mxu0
  %v758 = vpop.f32.mrb[0].mxu0
  %v759 = vadd.f32 %v679, %v758
  %v760 = vpop.f32.mrb[0].mxu0
  %761 = vdwg.mxu0
  %vm762 = vcmask 326656
  %763 = vst.msk [vmem:[%s19] sm:$0xff] %vm762, %v740
  %764 = vst.msk [vmem:[%s19 + $0x8] sm:$0xff] %vm762, %v743
  %765 = vst.msk [vmem:[%s19 + $0x10] sm:$0xff] %vm762, %v748
  %766 = vst.msk [vmem:[%s19 + $0x18] sm:$0xff] %vm762, %v751
  %767 = vst.msk [vmem:[%s19 + $0x20] sm:$0xff] %vm762, %v756
  %768 = vst.msk [vmem:[%s19 + $0x28] sm:$0xff] %vm762, %v759
  // Predicated region
  $region78: #{tpu_custom_call.1} parent=0 // pred_check
    _
  $region79: #{tpu_custom_call.1} parent=0 // pred_check_branch
    %770 = sbr.rel (0) target = $region81
  $region80: #{tpu_custom_call.1} parent=0 // pred_region
    _
  $region81: #{tpu_custom_call.1} parent=0 // pred_fallthru
    _
  // Predicated region
  $region82: #{tpu_custom_call.1} parent=0 // pred_check
    _
  $region83: #{tpu_custom_call.1} parent=0 // pred_check_branch
    %772 = sbr.rel (0) target = $region85
  $region84: #{tpu_custom_call.1} parent=0 // pred_region
    _
  $region85: #{tpu_custom_call.1} parent=0 // pred_fallthru
    _

</llo_original>
